<compile_context>
chip_gen: v7x
topology: tpu7x:2x2x1
jax: 0.10.0
libtpu: 0.0.40
codegen_flags: <defaults>
</compile_context>

<pallas_src>
import jax
import jax.numpy as jnp
from jax.experimental import pallas as pl
from jax.experimental.pallas import tpu as pltpu

_LANE = 128
_MAX_TB = 1024
_F32_MIN = float(jnp.finfo(jnp.float32).min)


def _round_up(x, m):
    return ((x + m - 1) // m) * m


# ----------------------------- tiling / budgets -----------------------------

def _vmem_limit_bytes():
    """Generation-aware scoped-VMEM request: 3/4 of physical, capped at 96 MiB.
    v7x (64 MiB physical) -> 48 MiB; v5e/v6e (128 MiB) -> 96 MiB."""
    cap = None
    try:
        cap = getattr(pltpu.get_tpu_info(), "vmem_capacity_bytes", None)
    except Exception:
        cap = None
    if not cap:
        cap = 64 * 1024 * 1024          # conservative (v7x-sized) fallback
    return int(min((cap * 3) // 4, 96 * 1024 * 1024))


def _choose_tiles(b, k, itemsize, vmem_limit, n_f32_temps):
    """Pick (tb, tk, nt_b, nt_k) so that the double-buffered logits tile plus
    ~n_f32_temps live (tb, tk) f32 temporaries fit the scoped VMEM limit."""
    usable = max(vmem_limit - (4 << 20), 8 << 20)
    max_elems = usable // (2 * itemsize + 4 * n_f32_temps)
    bp128 = _round_up(b, _LANE)

    rows_full_k = ((max_elems // k) // _LANE) * _LANE        # tb if tk == K
    if rows_full_k >= _LANE:
        tb = min(_MAX_TB, bp128, rows_full_k)
        tk = k                                # single K chunk (block == full dim)
    else:
        # Large K: stream over classes on a second ("arbitrary") grid axis.
        tb = min(256, bp128)
        tk = max(_LANE, ((max_elems // max(tb, _LANE)) // _LANE) * _LANE)
        tk = min(tk, _round_up(k, _LANE))

    # Megacore (v7x: 2 TCs shard the "parallel" batch axis): keep >= 2 batch
    # blocks when the batch allows; costs at most one extra step on 1-TC chips.
    if bp128 >= 2 * _LANE:
        tb = min(tb, _round_up(pl.cdiv(bp128, 2), _LANE))
    # Never let the block dim overrun B by a whole block: either a multiple of
    # 128 that fits in B, or exactly B (both satisfy the (8,128) rule).
    if tb > b:
        tb = b if b < _LANE else (b // _LANE) * _LANE
    return tb, tk, pl.cdiv(b, tb), pl.cdiv(k, tk)


# ----------------------------- kernel helpers -----------------------------

def _hash_u32(x):
    """splitmix/murmur-style 32-bit finalizer (counter-based PRNG)."""
    x = x ^ (x >> 16)
    x = x * jnp.uint32(0x7FEB352D)
    x = x ^ (x >> 15)
    x = x * jnp.uint32(0x846CA68B)
    x = x ^ (x >> 16)
    return x


def _col_to_row(col):
    """(tb, 1) per-row column -> lane-dense (1, 1, tb) output slab."""
    return col.reshape(1, 1, col.shape[0])


def _online_softmax_step(z, m_sc, s_sc, t_sc):
    """One streamed chunk of: running max m, s = sum e, t = sum e*z."""
    m_old = m_sc[...]
    m_new = jnp.maximum(m_old, jnp.max(z, axis=-1, keepdims=True))
    alpha = jnp.exp(m_old - m_new)                         # (tb, 1) rescale
    e = jnp.exp(z - m_new)
    s_sc[...] = alpha * s_sc[...] + jnp.sum(e, axis=-1, keepdims=True)
    # guard e==0 so user-provided -inf logits give 0 (matches torch's clamp)
    t_sc[...] = alpha * t_sc[...] + jnp.sum(jnp.where(e > 0.0, e * z, 0.0),
                                            axis=-1, keepdims=True)
    m_sc[...] = m_new
    return e, alpha


# --------------------------------- kernels ---------------------------------

def _make_logp_ent_kernel(k, tk, needs_mask):
    """log_prob(actions) + entropy, streamed over class chunks."""

    def kernel(logits_ref, actions_ref, logp_ref, ent_ref,
               m_sc, s_sc, t_sc, za_sc):
        j = pl.program_id(1)

        @pl.when(j == 0)
        def _():
            m_sc[...] = jnp.full(m_sc.shape, _F32_MIN, m_sc.dtype)
            s_sc[...] = jnp.zeros(s_sc.shape, s_sc.dtype)
            t_sc[...] = jnp.zeros(t_sc.shape, t_sc.dtype)
            za_sc[...] = jnp.zeros(za_sc.shape, za_sc.dtype)

        z = logits_ref[...].astype(jnp.float32)            # (tb, tk)
        lane = jax.lax.broadcasted_iota(jnp.int32, z.shape, 1)
        col = lane + j * tk                                 # global class index
        if needs_mask:                                      # K-tail garbage lanes
            z = jnp.where(col < k, z, _F32_MIN)

        _online_softmax_step(z, m_sc, s_sc, t_sc)

        # lane-dense (1,1,tb) actions -> (tb,1) column; one-hot gather of z[r, a[r]]
        a_col = actions_ref[...].reshape(z.shape[0], 1)
        # TODO(synk): out-of-range actions silently give logp = -lse (torch raises).
        za_sc[...] += jnp.sum(jnp.where(col == a_col, z, 0.0),
                              axis=-1, keepdims=True)

        @pl.when(j == pl.num_programs(1) - 1)
        def _():
            s = s_sc[...]
            lse = m_sc[...] + jnp.log(s)
            logp_ref[...] = _col_to_row(za_sc[...] - lse)
            ent_ref[...] = _col_to_row(lse - t_sc[...] / s)

    return kernel


def _make_sample_kernel(k, tk, needs_mask):
    """Fused sample + log_prob + entropy, streamed over class chunks."""

    def kernel(seed_ref, logits_ref, act_ref, logp_ref, ent_ref,
               m_sc, s_sc, t_sc, br_sc, bz_sc, bi_sc):
        i = pl.program_id(0)
        j = pl.program_id(1)

        @pl.when(j == 0)
        def _():
            m_sc[...] = jnp.full(m_sc.shape, _F32_MIN, m_sc.dtype)
            s_sc[...] = jnp.zeros(s_sc.shape, s_sc.dtype)
            t_sc[...] = jnp.zeros(t_sc.shape, t_sc.dtype)
            br_sc[...] = jnp.full(br_sc.shape, -1.0, br_sc.dtype)   # best ratio
            bz_sc[...] = jnp.zeros(bz_sc.shape, bz_sc.dtype)        # best z
            bi_sc[...] = jnp.zeros(bi_sc.shape, bi_sc.dtype)        # best index

        z = logits_ref[...].astype(jnp.float32)            # (tb, tk)
        tb = z.shape[0]
        lane = jax.lax.broadcasted_iota(jnp.int32, z.shape, 1)
        col = lane + j * tk
        if needs_mask:
            z = jnp.where(col < k, z, _F32_MIN)

        e, alpha = _online_softmax_step(z, m_sc, s_sc, t_sc)

        # ---- exponential-race sampling: argmax_k e_k / E_k, E_k ~ Exp(1) ----
        # counter-hash PRNG, uint32 arithmetic (tiling-invariant global element id)
        row = jax.lax.broadcasted_iota(jnp.int32, z.shape, 0)
        row_g = (i * tb + row).astype(jnp.uint32)
        ctr = row_g * jnp.uint32(k) + col.astype(jnp.uint32)
        seed = (seed_ref[0].astype(jnp.uint32) * jnp.uint32(0x9E3779B9)
                + jnp.uint32(0x85EBCA6B))
        bits = _hash_u32(ctr ^ seed)
        # uniform in [0,1) via mantissa bitcast; clamp away exact 0 before the log
        u = pltpu.bitcast((bits >> 9) | jnp.uint32(0x3F800000), jnp.float32) - 1.0
        e_noise = -jnp.log(jnp.maximum(u, 1e-20))          # Exp(1), strictly > 0
        ratio = e * pl.reciprocal(e_noise, approx=True)    # tie-region bias only

        r_max = jnp.max(ratio, axis=-1, keepdims=True)
        # TODO(synk): jnp.argmax has no Mosaic lowering; emulate with max + masked-min.
        idx = jnp.min(jnp.where(ratio == r_max, col, 2**31 - 1),
                      axis=-1, keepdims=True)
        z_win = jnp.sum(jnp.where(col == idx, z, 0.0), axis=-1, keepdims=True)

        br_old = alpha * br_sc[...]            # rescale running best to new max
        upd = r_max > br_old
        br_sc[...] = jnp.where(upd, r_max, br_old)
        bi_sc[...] = jnp.where(upd, idx, bi_sc[...])
        bz_sc[...] = jnp.where(upd, z_win, bz_sc[...])

        @pl.when(j == pl.num_programs(1) - 1)
        def _():
            s = s_sc[...]
            lse = m_sc[...] + jnp.log(s)
            act_ref[...] = _col_to_row(bi_sc[...])
            logp_ref[...] = _col_to_row(bz_sc[...] - lse)
            ent_ref[...] = _col_to_row(lse - t_sc[...] / s)

    return kernel


# -------------------------------- wrappers ---------------------------------

def _compiler_params(vmem_limit):
    return pltpu.CompilerParams(
        dimension_semantics=("parallel", "arbitrary"),
        vmem_limit_bytes=int(vmem_limit),
    )


def _row_spec(tb):
    return pl.BlockSpec((1, 1, tb), lambda i, j: (i, 0, 0))


def _logp_entropy(logits, actions, tiles=None):
    b, k = logits.shape
    vmem_limit = _vmem_limit_bytes()
    itemsize = jnp.dtype(logits.dtype).itemsize
    tb, tk, nt_b, nt_k = tiles or _choose_tiles(b, k, itemsize, vmem_limit,
                                                n_f32_temps=4)
    bp = nt_b * tb

    acts = actions.astype(jnp.int32)
    if bp != b:                      # pad only the tiny action vector, never logits
        acts = jnp.pad(acts, (0, bp - b))
    acts = acts.reshape(nt_b, 1, tb)

    kernel = _make_logp_ent_kernel(k, tk, needs_mask=(nt_k * tk != k))
    logp, ent = pl.pallas_call(
        kernel,
        out_shape=(jax.ShapeDtypeStruct((nt_b, 1, tb), jnp.float32),
                   jax.ShapeDtypeStruct((nt_b, 1, tb), jnp.float32)),
        grid=(nt_b, nt_k),
        in_specs=[pl.BlockSpec((tb, tk), lambda i, j: (i, j)),
                  _row_spec(tb)],
        out_specs=(_row_spec(tb), _row_spec(tb)),
        scratch_shapes=[pltpu.VMEM((tb, 1), jnp.float32)] * 4,
        compiler_params=_compiler_params(vmem_limit),
        cost_estimate=pl.CostEstimate(flops=8 * b * k, transcendentals=b * k,
                                      bytes_accessed=itemsize * b * k + 12 * b),
    )(logits, acts)
    return logp.reshape(bp)[:b], ent.reshape(bp)[:b]


def _sample_logp_entropy(logits, seed, tiles=None):
    b, k = logits.shape
    vmem_limit = _vmem_limit_bytes()
    itemsize = jnp.dtype(logits.dtype).itemsize
    tb, tk, nt_b, nt_k = tiles or _choose_tiles(b, k, itemsize, vmem_limit,
                                                n_f32_temps=6)
    bp = nt_b * tb
    seed_arr = jnp.asarray([seed], dtype=jnp.int32)

    kernel = _make_sample_kernel(k, tk, needs_mask=(nt_k * tk != k))
    acts, logp, ent = pl.pallas_call(
        kernel,
        out_shape=(jax.ShapeDtypeStruct((nt_b, 1, tb), jnp.int32),
                   jax.ShapeDtypeStruct((nt_b, 1, tb), jnp.float32),
                   jax.ShapeDtypeStruct((nt_b, 1, tb), jnp.float32)),
        grid=(nt_b, nt_k),
        in_specs=[pl.BlockSpec(memory_space=pltpu.MemorySpace.SMEM),   # seed
                  pl.BlockSpec((tb, tk), lambda i, j: (i, j))],
        out_specs=(_row_spec(tb), _row_spec(tb), _row_spec(tb)),
        scratch_shapes=[pltpu.VMEM((tb, 1), jnp.float32)] * 5
                       + [pltpu.VMEM((tb, 1), jnp.int32)],
        compiler_params=_compiler_params(vmem_limit),
        cost_estimate=pl.CostEstimate(flops=14 * b * k, transcendentals=2 * b * k,
                                      bytes_accessed=itemsize * b * k + 16 * b),
    )(seed_arr, logits)
    return acts.reshape(bp)[:b], logp.reshape(bp)[:b], ent.reshape(bp)[:b]


def categorical_dist(logits, actions=None, seed=0):
    """Pallas equivalent of CategoricalDist.forward(logits, actions)."""
    if actions is None:
        # TODO(synk): sampling is a valid Categorical draw (exponential race over
        # a counter-hash PRNG) but not bit-exact with torch's RNG stream.
        return _sample_logp_entropy(logits, seed)
    logp, ent = _logp_entropy(logits, actions)
    return actions, logp, ent


# ----------------------------------- demo -----------------------------------

def _reference(logits, actions):
    norm = jax.nn.log_softmax(logits.astype(jnp.float32), axis=-1)
    logp = jnp.take_along_axis(norm, actions[:, None], axis=-1)[:, 0]
    ent = -jnp.sum(jnp.exp(norm) * norm, axis=-1)
    return logp, ent


if __name__ == "__main__":
    key = jax.random.PRNGKey(0)
    k_logits, k_act, k_big = jax.random.split(key, 3)

    # --- small shapes, single K chunk ---
    B, K = 6, 10
    logits = jax.random.normal(k_logits, (B, K), dtype=jnp.float32)
    actions = jax.random.randint(k_act, (B,), 0, K, dtype=jnp.int32)

    a_out, logp, ent = categorical_dist(logits, actions)
    jax.block_until_ready((a_out, logp, ent))
    logp_ref, ent_ref = _reference(logits, actions)
    assert a_out.shape == (B,), "actions pass-through shape mismatch"
    assert jnp.allclose(logp, logp_ref, atol=1e-5), "logprob mismatch"
    assert jnp.allclose(ent, ent_ref, atol=1e-5), "entropy mismatch"

    a_s, logp_s, ent_s = categorical_dist(logits, actions=None, seed=123)
    jax.block_until_ready((a_s, logp_s, ent_s))
    assert a_s.shape == (B,) and a_s.dtype == jnp.int32, "sampled actions shape/dtype"
    assert bool(jnp.all((a_s >= 0) & (a_s < K))), "sampled actions out of range"
    logp_s_ref, _ = _reference(logits, a_s)
    assert jnp.allclose(logp_s, logp_s_ref, atol=1e-5), "sampled logprob mismatch"
    assert jnp.allclose(ent_s, ent_ref, atol=1e-5), "sampled-path entropy mismatch"

    # --- forced streaming-K path: online softmax/entropy/race + B and K tails ---
    B2, K2 = 200, 300
    logits2 = jax.random.normal(k_big, (B2, K2), dtype=jnp.float32)
    actions2 = jax.random.randint(k_act, (B2,), 0, K2, dtype=jnp.int32)
    tiles = (128, 128, pl.cdiv(B2, 128), pl.cdiv(K2, 128))   # (tb, tk, nt_b, nt_k)

    logp2, ent2 = _logp_entropy(logits2, actions2, tiles=tiles)
    a2, logp2s, ent2s = _sample_logp_entropy(logits2, seed=7, tiles=tiles)
    jax.block_until_ready((logp2, ent2, a2, logp2s, ent2s))
    logp2_ref, ent2_ref = _reference(logits2, actions2)
    assert jnp.allclose(logp2, logp2_ref, atol=2e-4), "streaming logprob mismatch"
    assert jnp.allclose(ent2, ent2_ref, atol=2e-4), "streaming entropy mismatch"
    assert bool(jnp.all((a2 >= 0) & (a2 < K2))), "streaming sample out of range"
    logp2s_ref, _ = _reference(logits2, a2)
    assert jnp.allclose(logp2s, logp2s_ref, atol=2e-4), "streaming sampled logprob"
    assert jnp.allclose(ent2s, ent2_ref, atol=2e-4), "streaming sampled entropy"

    print("KERNEL_OK")
</pallas_src>

<mosaic_0001>
module attributes {stable_mosaic.version = 11 : i64} {
  func.func @kernel(%arg0: i32, %arg1: i32, %arg2: memref<6x10xf32, #tpu.memory_space<vmem>>, %arg3: memref<1x1x6xi32, #tpu.memory_space<vmem>>, %arg4: memref<1x1x6xf32, #tpu.memory_space<vmem>>, %arg5: memref<1x1x6xf32, #tpu.memory_space<vmem>>, %arg6: memref<6x1xf32, #tpu.memory_space<vmem>>, %arg7: memref<6x1xf32, #tpu.memory_space<vmem>>, %arg8: memref<6x1xf32, #tpu.memory_space<vmem>>, %arg9: memref<6x1xf32, #tpu.memory_space<vmem>>) attributes {dimension_semantics = [#tpu.dimension_semantics<parallel>, #tpu.dimension_semantics<arbitrary>], iteration_bounds = array<i64: 1, 1>, scalar_prefetch = 0 : i64, scratch_operands = 4 : i64, tpu.core_type = #tpu.core_type<tc>, window_params = [{transform_indices = @transform_0, window_bounds = array<i64: 6, 10>}, {transform_indices = @transform_1, window_bounds = array<i64: 1, 1, 6>}, {transform_indices = @transform_2, window_bounds = array<i64: 1, 1, 6>}, {transform_indices = @transform_3, window_bounds = array<i64: 1, 1, 6>}]} {
    %c0_i32 = arith.constant 0 : i32
    %0 = arith.cmpi eq, %arg1, %c0_i32 : i32
    %1 = arith.extui %0 : i1 to i32
    %c0_i32_0 = arith.constant 0 : i32
    %2 = arith.cmpi ne, %1, %c0_i32_0 : i32
    scf.if %2 {
      %cst_29 = arith.constant -3.40282347E+38 : f32
      %49 = vector.broadcast %cst_29 : f32 to vector<6x1xf32>
      %c0_30 = arith.constant 0 : index
      %c0_31 = arith.constant 0 : index
      %50 = vector.load %arg6[%c0_30, %c0_31] : memref<6x1xf32, #tpu.memory_space<vmem>>, vector<6x1xf32>
      tpu.vector_store %arg6[%c0_30, %c0_31], %49 {strides = array<i32>} : memref<6x1xf32, #tpu.memory_space<vmem>>, vector<6x1xf32>,
      %cst_32 = arith.constant 0.000000e+00 : f32
      %51 = vector.broadcast %cst_32 : f32 to vector<6x1xf32>
      %c0_33 = arith.constant 0 : index
      %c0_34 = arith.constant 0 : index
      %52 = vector.load %arg7[%c0_33, %c0_34] : memref<6x1xf32, #tpu.memory_space<vmem>>, vector<6x1xf32>
      tpu.vector_store %arg7[%c0_33, %c0_34], %51 {strides = array<i32>} : memref<6x1xf32, #tpu.memory_space<vmem>>, vector<6x1xf32>,
      %cst_35 = arith.constant 0.000000e+00 : f32
      %53 = vector.broadcast %cst_35 : f32 to vector<6x1xf32>
      %c0_36 = arith.constant 0 : index
      %c0_37 = arith.constant 0 : index
      %54 = vector.load %arg8[%c0_36, %c0_37] : memref<6x1xf32, #tpu.memory_space<vmem>>, vector<6x1xf32>
      tpu.vector_store %arg8[%c0_36, %c0_37], %53 {strides = array<i32>} : memref<6x1xf32, #tpu.memory_space<vmem>>, vector<6x1xf32>,
      %cst_38 = arith.constant 0.000000e+00 : f32
      %55 = vector.broadcast %cst_38 : f32 to vector<6x1xf32>
      %c0_39 = arith.constant 0 : index
      %c0_40 = arith.constant 0 : index
      %56 = vector.load %arg9[%c0_39, %c0_40] : memref<6x1xf32, #tpu.memory_space<vmem>>, vector<6x1xf32>
      tpu.vector_store %arg9[%c0_39, %c0_40], %55 {strides = array<i32>} : memref<6x1xf32, #tpu.memory_space<vmem>>, vector<6x1xf32>,
    } else {
    }
    %c0 = arith.constant 0 : index
    %c0_1 = arith.constant 0 : index
    %3 = vector.load %arg2[%c0, %c0_1] : memref<6x10xf32, #tpu.memory_space<vmem>>, vector<6x10xf32>
    %4 = tpu.iota {dimensions = array<i32: 1>} : vector<6x10xi32>
    %c10_i32 = arith.constant 10 : i32
    %5 = arith.muli %arg1, %c10_i32 : i32
    %6 = vector.broadcast %5 : i32 to vector<6x10xi32>
    %7 = arith.addi %4, %6 : vector<6x10xi32>
    %c0_2 = arith.constant 0 : index
    %c0_3 = arith.constant 0 : index
    %8 = vector.load %arg6[%c0_2, %c0_3] : memref<6x1xf32, #tpu.memory_space<vmem>>, vector<6x1xf32>
    %cst = arith.constant dense<0xFF800000> : vector<6xf32>
    %9 = vector.multi_reduction <maximumf>, %3, %cst [1] : vector<6x10xf32> to vector<6xf32>
    %10 = vector.shape_cast %9 : vector<6xf32> to vector<6x1xf32>
    %11 = arith.maximumf %8, %10 : vector<6x1xf32>
    %12 = arith.subf %8, %11 : vector<6x1xf32>
    %13 = math.exp %12 : vector<6x1xf32>
    %14 = vector.broadcast %11 : vector<6x1xf32> to vector<6x10xf32>
    %15 = arith.subf %3, %14 : vector<6x10xf32>
    %16 = math.exp %15 : vector<6x10xf32>
    %c0_4 = arith.constant 0 : index
    %c0_5 = arith.constant 0 : index
    %17 = vector.load %arg7[%c0_4, %c0_5] : memref<6x1xf32, #tpu.memory_space<vmem>>, vector<6x1xf32>
    %18 = arith.mulf %13, %17 : vector<6x1xf32>
    %cst_6 = arith.constant dense<0.000000e+00> : vector<6xf32>
    %19 = vector.multi_reduction <add>, %16, %cst_6 [1] : vector<6x10xf32> to vector<6xf32>
    %20 = vector.shape_cast %19 : vector<6xf32> to vector<6x1xf32>
    %21 = arith.addf %18, %20 : vector<6x1xf32>
    %c0_7 = arith.constant 0 : index
    %c0_8 = arith.constant 0 : index
    %22 = vector.load %arg7[%c0_7, %c0_8] : memref<6x1xf32, #tpu.memory_space<vmem>>, vector<6x1xf32>
    tpu.vector_store %arg7[%c0_7, %c0_8], %21 {strides = array<i32>} : memref<6x1xf32, #tpu.memory_space<vmem>>, vector<6x1xf32>,
    %c0_9 = arith.constant 0 : index
    %c0_10 = arith.constant 0 : index
    %23 = vector.load %arg8[%c0_9, %c0_10] : memref<6x1xf32, #tpu.memory_space<vmem>>, vector<6x1xf32>
    %24 = arith.mulf %13, %23 : vector<6x1xf32>
    %cst_11 = arith.constant 0.000000e+00 : f32
    %25 = vector.broadcast %cst_11 : f32 to vector<6x10xf32>
    %26 = arith.cmpf ogt, %16, %25 : vector<6x10xf32>
    %27 = arith.mulf %16, %3 : vector<6x10xf32>
    %cst_12 = arith.constant 0.000000e+00 : f32
    %28 = vector.broadcast %cst_12 : f32 to vector<6x10xf32>
    %29 = arith.select %26, %27, %28 : vector<6x10xi1>, vector<6x10xf32>
    %cst_13 = arith.constant dense<0.000000e+00> : vector<6xf32>
    %30 = vector.multi_reduction <add>, %29, %cst_13 [1] : vector<6x10xf32> to vector<6xf32>
    %31 = vector.shape_cast %30 : vector<6xf32> to vector<6x1xf32>
    %32 = arith.addf %24, %31 : vector<6x1xf32>
    %c0_14 = arith.constant 0 : index
    %c0_15 = arith.constant 0 : index
    %33 = vector.load %arg8[%c0_14, %c0_15] : memref<6x1xf32, #tpu.memory_space<vmem>>, vector<6x1xf32>
    tpu.vector_store %arg8[%c0_14, %c0_15], %32 {strides = array<i32>} : memref<6x1xf32, #tpu.memory_space<vmem>>, vector<6x1xf32>,
    %c0_16 = arith.constant 0 : index
    %c0_17 = arith.constant 0 : index
    %34 = vector.load %arg6[%c0_16, %c0_17] : memref<6x1xf32, #tpu.memory_space<vmem>>, vector<6x1xf32>
    tpu.vector_store %arg6[%c0_16, %c0_17], %11 {strides = array<i32>} : memref<6x1xf32, #tpu.memory_space<vmem>>, vector<6x1xf32>,
    %c0_18 = arith.constant 0 : index
    %c0_19 = arith.constant 0 : index
    %c0_20 = arith.constant 0 : index
    %35 = vector.load %arg3[%c0_18, %c0_19, %c0_20] : memref<1x1x6xi32, #tpu.memory_space<vmem>>, vector<1x1x6xi32>
    %36 = vector.shape_cast %35 : vector<1x1x6xi32> to vector<6x1xi32>
    %c0_21 = arith.constant 0 : index
    %c0_22 = arith.constant 0 : index
    %37 = vector.load %arg9[%c0_21, %c0_22] : memref<6x1xf32, #tpu.memory_space<vmem>>, vector<6x1xf32>
    %38 = vector.broadcast %36 : vector<6x1xi32> to vector<6x10xi32>
    %39 = arith.cmpi eq, %7, %38 : vector<6x10xi32>
    %cst_23 = arith.constant 0.000000e+00 : f32
    %40 = vector.broadcast %cst_23 : f32 to vector<6x10xf32>
    %41 = arith.select %39, %3, %40 : vector<6x10xi1>, vector<6x10xf32>
    %cst_24 = arith.constant dense<0.000000e+00> : vector<6xf32>
    %42 = vector.multi_reduction <add>, %41, %cst_24 [1] : vector<6x10xf32> to vector<6xf32>
    %43 = vector.shape_cast %42 : vector<6xf32> to vector<6x1xf32>
    %44 = arith.addf %37, %43 : vector<6x1xf32>
    %c0_25 = arith.constant 0 : index
    %c0_26 = arith.constant 0 : index
    %45 = vector.load %arg9[%c0_25, %c0_26] : memref<6x1xf32, #tpu.memory_space<vmem>>, vector<6x1xf32>
    tpu.vector_store %arg9[%c0_25, %c0_26], %44 {strides = array<i32>} : memref<6x1xf32, #tpu.memory_space<vmem>>, vector<6x1xf32>,
    %c0_i32_27 = arith.constant 0 : i32
    %46 = arith.cmpi eq, %arg1, %c0_i32_27 : i32
    %47 = arith.extui %46 : i1 to i32
    %c0_i32_28 = arith.constant 0 : i32
    %48 = arith.cmpi ne, %47, %c0_i32_28 : i32
    scf.if %48 {
      %c0_29 = arith.constant 0 : index
      %c0_30 = arith.constant 0 : index
      %49 = vector.load %arg7[%c0_29, %c0_30] : memref<6x1xf32, #tpu.memory_space<vmem>>, vector<6x1xf32>
      %c0_31 = arith.constant 0 : index
      %c0_32 = arith.constant 0 : index
      %50 = vector.load %arg6[%c0_31, %c0_32] : memref<6x1xf32, #tpu.memory_space<vmem>>, vector<6x1xf32>
      %51 = math.log %49 : vector<6x1xf32>
      %52 = arith.addf %50, %51 : vector<6x1xf32>
      %c0_33 = arith.constant 0 : index
      %c0_34 = arith.constant 0 : index
      %53 = vector.load %arg9[%c0_33, %c0_34] : memref<6x1xf32, #tpu.memory_space<vmem>>, vector<6x1xf32>
      %54 = arith.subf %53, %52 : vector<6x1xf32>
      %55 = vector.shape_cast %54 : vector<6x1xf32> to vector<1x1x6xf32>
      %c0_35 = arith.constant 0 : index
      %c0_36 = arith.constant 0 : index
      %c0_37 = arith.constant 0 : index
      %56 = vector.load %arg4[%c0_35, %c0_36, %c0_37] : memref<1x1x6xf32, #tpu.memory_space<vmem>>, vector<1x1x6xf32>
      tpu.vector_store %arg4[%c0_35, %c0_36, %c0_37], %55 {strides = array<i32>} : memref<1x1x6xf32, #tpu.memory_space<vmem>>, vector<1x1x6xf32>,
      %c0_38 = arith.constant 0 : index
      %c0_39 = arith.constant 0 : index
      %57 = vector.load %arg8[%c0_38, %c0_39] : memref<6x1xf32, #tpu.memory_space<vmem>>, vector<6x1xf32>
      %58 = arith.divf %57, %49 : vector<6x1xf32>
      %59 = arith.subf %52, %58 : vector<6x1xf32>
      %60 = vector.shape_cast %59 : vector<6x1xf32> to vector<1x1x6xf32>
      %c0_40 = arith.constant 0 : index
      %c0_41 = arith.constant 0 : index
      %c0_42 = arith.constant 0 : index
      %61 = vector.load %arg5[%c0_40, %c0_41, %c0_42] : memref<1x1x6xf32, #tpu.memory_space<vmem>>, vector<1x1x6xf32>
      tpu.vector_store %arg5[%c0_40, %c0_41, %c0_42], %60 {strides = array<i32>} : memref<1x1x6xf32, #tpu.memory_space<vmem>>, vector<1x1x6xf32>,
    } else {
    }
    return
  }
  func.func @transform_0(%arg0: i32, %arg1: i32) -> (i32, i32) {
    %c0_i32 = arith.constant 0 : i32
    return %arg0, %arg1 : i32, i32
  }
  func.func @transform_1(%arg0: i32, %arg1: i32) -> (i32, i32, i32) {
    %c0_i32 = arith.constant 0 : i32
    %c0_i32_0 = arith.constant 0 : i32
    %c0_i32_1 = arith.constant 0 : i32
    return %arg0, %c0_i32, %c0_i32_0 : i32, i32, i32
  }
  func.func @transform_2(%arg0: i32, %arg1: i32) -> (i32, i32, i32) {
    %c0_i32 = arith.constant 0 : i32
    %c0_i32_0 = arith.constant 0 : i32
    %c0_i32_1 = arith.constant 0 : i32
    return %arg0, %c0_i32, %c0_i32_0 : i32, i32, i32
  }
  func.func @transform_3(%arg0: i32, %arg1: i32) -> (i32, i32, i32) {
    %c0_i32 = arith.constant 0 : i32
    %c0_i32_0 = arith.constant 0 : i32
    %c0_i32_1 = arith.constant 0 : i32
    return %arg0, %c0_i32, %c0_i32_0 : i32, i32, i32
  }
}

</mosaic_0001>

<llo_original>
// kernel: tpu_custom_call.1
$region0: #{tpu_custom_call.1}
  #allocation0 [shape = 'u32[]', space=smem, size = 0x4, offset = 0x4, fixed_abs, tag = 'smem constant byte address 0x4 - core index']
  #allocation1 [shape = 'u32[144,128]{1,0:T(1,128)}', space=vmem, size = 0x12000, scoped, tag = 'internal scratch']
  #allocation2 [shape = 'f32[6,1]{1,0:T(8,128)}', space=vmem, size = 0x1000, scoped, tag = 'scratch operand']
  #allocation3 [shape = 'f32[6,1]{1,0:T(8,128)}', space=vmem, size = 0x1000, scoped, tag = 'scratch operand']
  #allocation4 [shape = 'f32[6,1]{1,0:T(8,128)}', space=vmem, size = 0x1000, scoped, tag = 'scratch operand']
  #allocation5 [shape = 'f32[6,1]{1,0:T(8,128)}', space=vmem, size = 0x1000, scoped, tag = 'scratch operand']
  %s0 = inlined_call_operand.hbm [shape: f32[6,10], index: 0, kind: input, shape index: {}]
  %s1 = inlined_call_operand.vmem [shape: s32[1,1,6], index: 1, kind: input, shape index: {}]
  %s2 = inlined_call_operand.hbm [shape: f32[1,1,6], index: 2, kind: output, shape index: {0}]
  %s3 = inlined_call_operand.hbm [shape: f32[1,1,6], index: 3, kind: output, shape index: {1}]
  %4 = xla_tuple %s2, %s3
  %s5 = sld [smem:[#allocation0]]
  $region38: #{tpu_custom_call.1} parent=0
    _
  %s7 = ssub.s32 1, %s5
  %s8 = scalar_select 0, %s7, %s5
  $region1: #{tpu_custom_call.1} parent=0
    #allocation6 [shape = 'u8[4096]{0}', space=vmem, size = 0x1000, scoped, tag = 'input window, operand 0, single buffered']
    #allocation7 [shape = 's32[1]{0}', space=sflag, size = 0x4, scoped, tag = 'scoped memory for tpu_custom_call.1']
    #allocation8 [shape = 's32[1]{0}', space=sflag, size = 0x4, scoped, tag = 'scoped memory for tpu_custom_call.1']
    #allocation9 [shape = 'u8[512]{0}', space=vmem, size = 0x400, scoped, tag = 'output window, operand 0, single buffered']
    #allocation10 [shape = 'u8[512]{0}', space=vmem, size = 0x400, scoped, tag = 'output window, operand 1, single buffered']
    #allocation11 [shape = 's32[1]{0}', space=sflag, size = 0x4, scoped, tag = 'scoped memory for tpu_custom_call.1']
    %9 = vsyncpa [#allocation7], 0
    %10 = vsyncpa [#allocation8], 0
    %11 = vsyncpa [#allocation11], 0
    // Predicated region
    $region2: #{tpu_custom_call.1} parent=1 // pred_check
      _
    $region3: #{tpu_custom_call.1} parent=1 // pred_check_branch
      %13 = sbr.rel (0) target = $region5
    $region4: #{tpu_custom_call.1} parent=1 // pred_region
      %s15 = ssub.s32 128, 128
      %16 = vsyncadd [#allocation7], %s15
      %s18 = sshll.u32 [#allocation6], 4
      %s19 = int_to_ptr.vmem [resolvable:$true] %s18
      %21 = dma.hbm_to_vmem [thread:$0]  %s0, 128, %s19, [#allocation7]
    $region5: #{tpu_custom_call.1} parent=1 // pred_fallthru
      _
    // Predicated region
    $region6: #{tpu_custom_call.1} parent=1 // pred_check
      _
    $region7: #{tpu_custom_call.1} parent=1 // pred_check_branch
      %23 = sbr.rel (0) target = $region9
    $region8: #{tpu_custom_call.1} parent=1 // pred_region
      _
    $region9: #{tpu_custom_call.1} parent=1 // pred_fallthru
      _
    // Predicated region
    $region10: #{tpu_custom_call.1} parent=1 // pred_check
      _
    $region11: #{tpu_custom_call.1} parent=1 // pred_check_branch
      %25 = sbr.rel (0) target = $region13
    $region12: #{tpu_custom_call.1} parent=1 // pred_region
      %26 = dma.done [#allocation7], 128
    $region13: #{tpu_custom_call.1} parent=1 // pred_fallthru
      _
    %p27 = scmp.eq.s32.totalorder 0, 0
    // Predicated region
    $region14: #{tpu_custom_call.1} parent=1 // pred_check
      %p28 = pneg %p27
    $region15: #{tpu_custom_call.1} parent=1 // pred_check_branch
      %30 = sbr.rel (%p28) target = $region17
    $region16: #{tpu_custom_call.1} parent=1 // pred_region
      %vm31 = vcmask 5120
      %32 = vst.msk [vmem:[#allocation2] sm:$0x3f] %vm31, -3.4028235e+38
      %33 = vst.msk [vmem:[#allocation3] sm:$0x3f] %vm31, 0.0
      %34 = vst.msk [vmem:[#allocation4] sm:$0x3f] %vm31, 0.0
      %35 = vst.msk [vmem:[#allocation5] sm:$0x3f] %vm31, 0.0
    $region17: #{tpu_custom_call.1} parent=1 // pred_fallthru
      _
    %v36 = vld [vmem:[#allocation6] sm:$0x3f]
    %v37 = vlaneseq
    %v38 = vand.u32 %v37, 127
    %s39 = smul.u32 0, 10
    %v40 = vstv %s39
    %v41 = vadd.s32 %v38, %v40
    %v42 = vld [vmem:[#allocation2] sm:$0x3f]
    %vm43 = vcmask 78848
    %v44 = vsel %vm43, %v36, -inf
    %45 = vmax.xlane.f32.xlu0 %v44
    %v46 = vpop.xlane.xlu0 %45
    %v47 = vmax.f32 %v42, %v46
    %v48 = vsub.f32 %v42, %v47
    %v49 = vmul.f32 %v48, 1.442695
    %v50 = vpow.pop %v49
    %52 = vset.pattern.permute.xlu0 0
    %53 = vperm.xlu0 %52, %v47
    %v54 = vpop.permute.xlu0 %53
    %v56 = vsub.f32 %v36, %v54
    %v57 = vmul.f32 %v56, 1.442695
    %v58 = vpow.pop %v57
    %v59 = vld [vmem:[#allocation3] sm:$0x3f]
    %v60 = vmul.f32 %v50, %v59
    %v61 = vsel %vm43, %v58, 0.0
    %62 = vadd.xlane.f32.xlu0 %v61
    %v63 = vpop.xlane.xlu0 %62
    %v64 = vadd.f32 %v60, %v63
    %vm65 = vcmask 5120
    %66 = vst.msk [vmem:[#allocation3] sm:$0x3f] %vm65, %v64
    %v67 = vld [vmem:[#allocation4] sm:$0x3f]
    %v68 = vmul.f32 %v50, %v67
    %vm69 = vcmp.gt.f32.partialorder %v58, 0.0
    %v70 = vmul.f32 %v58, %v36
    %v71 = vsel %vm69, %v70, 0.0
    %v72 = vsel %vm43, %v71, 0.0
    %73 = vadd.xlane.f32.xlu0 %v72
    %v74 = vpop.xlane.xlu0 %73
    %v75 = vadd.f32 %v68, %v74
    %76 = vst.msk [vmem:[#allocation4] sm:$0x3f] %vm65, %v75
    %77 = vst.msk [vmem:[#allocation2] sm:$0x3f] %vm65, %v47
    %v78 = vld [vmem:[%s1] sm:$0x1]
    %v79 = vlaneseq
    %v80 = vshrl.u32 %v79, 7
    %v81 = vsub.s32 0, %v80
    %v82 = vrot.slane %v78, %v81
    %84 = vbcast.lane.b32.xlu0 %v82, 256
    %v85 = vpop.permute.xlu0 %84
    %v86 = vld [vmem:[#allocation5] sm:$0x3f]
    %vm87 = vcmp.eq.s32.totalorder %v41, %v85
    %v88 = vsel %vm87, %v36, 0.0
    %v89 = vsel %vm43, %v88, 0.0
    %90 = vadd.xlane.f32.xlu0 %v89
    %v91 = vpop.xlane.xlu0 %90
    %v92 = vadd.f32 %v86, %v91
    %93 = vst.msk [vmem:[#allocation5] sm:$0x3f] %vm65, %v92
    // Predicated region
    $region18: #{tpu_custom_call.1} parent=1 // pred_check
      %p94 = pneg %p27
    $region19: #{tpu_custom_call.1} parent=1 // pred_check_branch
      %96 = sbr.rel (%p94) target = $region21
    $region20: #{tpu_custom_call.1} parent=1 // pred_region
      %v97 = vld [vmem:[#allocation3] sm:$0x3f]
      %v98 = vld [vmem:[#allocation2] sm:$0x3f]
      %v99 = vlog2.pop %v97
      %v100 = vmul.f32 %v99, 0.6931472
      %v101 = vadd.f32 %v98, %v100
      %v102 = vld [vmem:[#allocation5] sm:$0x3f]
      %v103 = vsub.f32 %v102, %v101
      %105 = vset.pattern.permute.xlu0 0
      %106 = vperm.xlu0 %105, %v103
      %v107 = vpop.permute.xlu0 %106
      %v108 = vlaneseq
      %v109 = vshrl.u32 %v108, 7
      %v110 = vsub.s32 %v38, %v109
      %v111 = vrot.slane %v107, %v110
      %vm113 = vcmask 40960
      %114 = vst.msk [vmem:[#allocation9] sm:$0x1] %vm113, %v111
      %v115 = vld [vmem:[#allocation4] sm:$0x3f]
      %v116 = vrcp.pop %v97
      %v117 = vmul.f32 %v115, %v116
      %v118 = vsub.f32 %v101, %v117
      %120 = vset.pattern.permute.xlu0 0
      %121 = vperm.xlu0 %120, %v118
      %v122 = vpop.permute.xlu0 %121
      %v123 = vlaneseq
      %v124 = vshrl.u32 %v123, 7
      %v125 = vsub.s32 %v38, %v124
      %v126 = vrot.slane %v122, %v125
      %128 = vst.msk [vmem:[#allocation10] sm:$0x1] %vm113, %v126
    $region21: #{tpu_custom_call.1} parent=1 // pred_fallthru
      _
    // Predicated region
    $region22: #{tpu_custom_call.1} parent=1 // pred_check
      _
    $region23: #{tpu_custom_call.1} parent=1 // pred_check_branch
      %130 = sbr.rel (0) target = $region25
    $region24: #{tpu_custom_call.1} parent=1 // pred_region
      %s132 = ssub.s32 16, 16
      %133 = vsyncadd [#allocation8], %s132
      %s135 = sshll.u32 [#allocation9], 4
      %s136 = int_to_ptr.vmem [resolvable:$true] %s135
      %138 = dma.vmem_to_hbm [thread:$0]  %s136, 16, %s2, [#allocation8]
    $region25: #{tpu_custom_call.1} parent=1 // pred_fallthru
      _
    // Predicated region
    $region26: #{tpu_custom_call.1} parent=1 // pred_check
      _
    $region27: #{tpu_custom_call.1} parent=1 // pred_check_branch
      %140 = sbr.rel (0) target = $region29
    $region28: #{tpu_custom_call.1} parent=1 // pred_region
      %s142 = ssub.s32 16, 16
      %143 = vsyncadd [#allocation11], %s142
      %s145 = sshll.u32 [#allocation10], 4
      %s146 = int_to_ptr.vmem [resolvable:$true] %s145
      %148 = dma.vmem_to_hbm [thread:$0]  %s146, 16, %s3, [#allocation11]
    $region29: #{tpu_custom_call.1} parent=1 // pred_fallthru
      _
    // Predicated region
    $region30: #{tpu_custom_call.1} parent=1 // pred_check
      _
    $region31: #{tpu_custom_call.1} parent=1 // pred_check_branch
      %150 = sbr.rel (0) target = $region33
    $region32: #{tpu_custom_call.1} parent=1 // pred_region
      %151 = dma.done [#allocation8], 16
    $region33: #{tpu_custom_call.1} parent=1 // pred_fallthru
      _
    // Predicated region
    $region34: #{tpu_custom_call.1} parent=1 // pred_check
      _
    $region35: #{tpu_custom_call.1} parent=1 // pred_check_branch
      %153 = sbr.rel (0) target = $region37
    $region36: #{tpu_custom_call.1} parent=1 // pred_region
      %154 = dma.done [#allocation11], 16
    $region37: #{tpu_custom_call.1} parent=1 // pred_fallthru
      _
    %155 = vsyncpa [#allocation7], 1
    %156 = vsyncpa [#allocation8], 1
    %157 = vsyncpa [#allocation11], 1

</llo_original>
